<compile_context>
chip_gen: v6e
topology: v6e:2x2x1
jax: 0.10.0
libtpu: 0.0.40
codegen_flags: <defaults>
</compile_context>

<pallas_src>
import functools

import jax
import jax.numpy as jnp
from jax.experimental import pallas as pl
from jax.experimental.pallas import tpu as pltpu

LANE = 128
SUBLANE = 8


def _sum_to_1x1(v):
    # (rows, 128) -> (1, 1): sublane-axis reduce first (mostly plain vreg adds on the
    # VALU), then a single 128-lane XLU reduce.
    return jnp.sum(jnp.sum(v, axis=0, keepdims=True), axis=1, keepdims=True)


def _tversky_partials_kernel(x_ref, y_ref, tp_ref, sx_ref, cnt_ref,
                             *, C, R, rt, kps, need_mask):
    """Accumulates per-(b, split, c) partial sums across the row-block grid axis.

    x_ref:   (1, C, rt, 128) activations (f32/bf16; upcast in-register)
    y_ref:   (1, 1, rt, 128) integer label map (any int dtype; upcast in-register)
    tp_ref:  (1, 1, C, 1)    sum of x where label == c
    sx_ref:  (1, 1, C, 1)    sum of x
    cnt_ref: (1, 1, C, 1)    count of label == c   (f32; exact below 2^24 per tile)
    """
    s = pl.program_id(1)
    k = pl.program_id(2)

    @pl.when(k == 0)
    def _init():
        # One-vreg, output-resident accumulators; init cost is negligible.
        tp_ref[...] = jnp.zeros_like(tp_ref)
        sx_ref[...] = jnp.zeros_like(sx_ref)
        cnt_ref[...] = jnp.zeros_like(cnt_ref)

    lab = y_ref[0, 0].astype(jnp.int32)                 # (rt, 128)

    def accumulate(lab_t, load_x):
        # Per-channel scalar compares: no channel iota, no one-hot materialization.
        for c in range(C):
            xc = load_x(c)                              # (rt, 128) f32
            m = lab_t == c
            tp_ref[0, 0, c:c + 1, :] += _sum_to_1x1(jnp.where(m, xc, 0.0))
            sx_ref[0, 0, c:c + 1, :] += _sum_to_1x1(xc)
            cnt_ref[0, 0, c:c + 1, :] += _sum_to_1x1(jnp.where(m, 1.0, 0.0))

    def load_clean(c):
        return x_ref[0, c].astype(jnp.float32)

    if need_mask:
        row0 = (s * kps + k) * rt                       # first global row of this block
        tile_is_ragged = row0 + rt > R

        @pl.when(tile_is_ragged)
        def _masked():
            rows = row0 + jax.lax.broadcasted_iota(jnp.int32, (rt, LANE), 0)
            valid = rows < R
            lab_m = jnp.where(valid, lab, C)            # C is out of range -> never matches
            accumulate(lab_m, lambda c: jnp.where(valid, load_clean(c), 0.0))

        @pl.when(jnp.logical_not(tile_is_ragged))
        def _clean():
            accumulate(lab, load_clean)
    else:
        accumulate(lab, load_clean)


def tversky_loss(x, y, *, alpha=0.3, beta=0.7, smooth=1.0,
                 batch_dice=False, do_bg=True,
                 block_bytes=2 << 20, num_splits=None):
    """TverskyLoss.forward (apply_nonlin=None, square=False, loss_mask=None).

    x: (B, C, *spatial) float activations (f32 or bf16); no nonlinearity applied
       (module default apply_nonlin=None).
    y: (B, *spatial) or (B, 1, *spatial) integer label map with values in [0, C).
       Out-of-range labels contribute to no class (same as jax.nn.one_hot).
       Pass int8 labels / bf16 activations directly to cut HBM traffic; the kernel
       upcasts in-register.
    """
    # TODO(synk): apply_nonlin, square=True, loss_mask and one-hot gt (y.shape == x.shape)
    # variants of the module are not implemented in the kernel.
    B, C = x.shape[0], x.shape[1]
    S = 1
    for d in x.shape[2:]:
        S *= d
    assert jnp.issubdtype(y.dtype, jnp.integer), "y must be an integer label map"
    assert y.size == B * S, "y must have shape (B, *spatial) or (B, 1, *spatial)"

    x3 = x.reshape(B, C, S)
    y2 = y.reshape(B, S)

    s_pad = ((S + LANE - 1) // LANE) * LANE
    if s_pad != S:
        # TODO(synk): host-side pad is one extra pass over the data; only taken when
        # prod(spatial) is not a multiple of 128.  Padded x=0 / label=C are inert.
        x3 = jnp.pad(x3, ((0, 0), (0, 0), (0, s_pad - S)))
        y2 = jnp.pad(y2, ((0, 0), (0, s_pad - S)), constant_values=C)
    R = s_pad // LANE
    x4 = x3.reshape(B, C, R, LANE)
    y4 = y2.reshape(B, 1, R, LANE)

    # Row tile: x block ~= block_bytes (default 2 MiB), a multiple of 8 rows (or full R).
    # VMEM use ~= 2 * (x_block + y_block) since accumulators are tiny; safe for the
    # 16/32 MiB default scoped VMEM on every generation.
    x_item = jnp.dtype(x.dtype).itemsize
    target_rows = max(SUBLANE, int(block_bytes) // (C * LANE * x_item))
    target_rows = max(SUBLANE, (target_rows // SUBLANE) * SUBLANE)
    rt = R if R <= target_rows else target_rows
    nrb = (R + rt - 1) // rt                  # number of row blocks

    # Optional core-split of the row-block axis: keeps both v7x TensorCores busy when the
    # batch alone cannot (B == 1).
    if num_splits is None:
        num_splits = 2 if B == 1 else 1
    ns = max(1, min(int(num_splits), nrb))
    kps = (nrb + ns - 1) // ns                # row blocks per split
    need_mask = (ns * kps * rt) != R          # ragged last block and/or phantom blocks

    if ns * kps > nrb:                        # phantom blocks exist: clamp the DMA index
        def _row_block(split, kk):
            return jnp.minimum(split * kps + kk, nrb - 1)
    else:
        def _row_block(split, kk):
            return split * kps + kk

    kernel = functools.partial(_tversky_partials_kernel,
                               C=C, R=R, rt=rt, kps=kps, need_mask=need_mask)

    part_shape = jax.ShapeDtypeStruct((B, ns, C, 1), jnp.float32)
    part_spec = pl.BlockSpec((1, 1, C, 1), lambda b, s, k: (b, s, 0, 0))

    tp_p, sx_p, cnt_p = pl.pallas_call(
        kernel,
        grid=(B, ns, kps),
        in_specs=[
            pl.BlockSpec((1, C, rt, LANE), lambda b, s, k: (b, 0, _row_block(s, k), 0)),
            pl.BlockSpec((1, 1, rt, LANE), lambda b, s, k: (b, 0, _row_block(s, k), 0)),
        ],
        out_specs=(part_spec, part_spec, part_spec),
        out_shape=(part_shape, part_shape, part_shape),
        compiler_params=pltpu.CompilerParams(
            dimension_semantics=("parallel", "parallel", "arbitrary")),
    )(x4, y4)

    # Combine split partials and finish the (tiny) Tversky ratio in plain JAX.
    tp = jnp.sum(tp_p[..., 0], axis=1)        # (B, C)
    sx = jnp.sum(sx_p[..., 0], axis=1)
    cnt = jnp.sum(cnt_p[..., 0], axis=1)
    if batch_dice:
        tp, sx, cnt = tp.sum(0), sx.sum(0), cnt.sum(0)
    fp = sx - tp                              # == sum(x * (1 - onehot))
    fn = cnt - tp                             # == sum((1 - x) * onehot)
    tversky = (tp + smooth) / (tp + alpha * fp + beta * fn + smooth)
    if not do_bg:
        tversky = tversky[1:] if batch_dice else tversky[:, 1:]
    return -jnp.mean(tversky)


def _reference_loss(x, y, *, alpha=0.3, beta=0.7, smooth=1.0, batch_dice=False, do_bg=True):
    # Pure-JAX mirror of the PyTorch module.
    xf = x.astype(jnp.float32)
    B, C = xf.shape[0], xf.shape[1]
    y_lab = y.reshape(B, *xf.shape[2:])
    y_onehot = jax.nn.one_hot(y_lab, C, axis=1, dtype=jnp.float32)
    axes = tuple(range(2, xf.ndim))
    if batch_dice:
        axes = (0,) + axes
    tp = jnp.sum(xf * y_onehot, axis=axes)
    fp = jnp.sum(xf * (1.0 - y_onehot), axis=axes)
    fn = jnp.sum((1.0 - xf) * y_onehot, axis=axes)
    tversky = (tp + smooth) / (tp + alpha * fp + beta * fn + smooth)
    if not do_bg:
        tversky = tversky[1:] if batch_dice else tversky[:, 1:]
    return -jnp.mean(tversky)


if __name__ == "__main__":
    key = jax.random.PRNGKey(0)
    kx, ky, kx2, ky2, kx3, ky3 = jax.random.split(key, 6)

    def check(got, want, tol, name):
        got = float(got)
        want = float(want)
        assert abs(got - want) <= tol * (1.0 + abs(want)), (name, got, want)

    # 1) Default path: B=2, C=4, 16x16 (single dense row block per batch element).
    B, C, H, W = 2, 4, 16, 16
    x = jax.random.uniform(kx, (B, C, H, W), dtype=jnp.float32)
    y = jax.random.randint(ky, (B, H, W), 0, C, dtype=jnp.int32)
    loss = tversky_loss(x, y)
    jax.block_until_ready(loss)
    check(loss, _reference_loss(x, y), 1e-5, "default")

    # 1b) Wrapper-level module options reuse the same kernel partials.
    loss_bd = tversky_loss(x, y, batch_dice=True, do_bg=False)
    jax.block_until_ready(loss_bd)
    check(loss_bd, _reference_loss(x, y, batch_dice=True, do_bg=False), 1e-5, "batch_dice")

    # 2) Ragged spatial extent (S=130, not a multiple of 128): host-pad path, (B,1,*sp) labels.
    H2, W2 = 10, 13
    x2 = jax.random.uniform(kx2, (B, C, H2, W2), dtype=jnp.float32)
    y2 = jax.random.randint(ky2, (B, 1, H2, W2), 0, C, dtype=jnp.int32)
    loss2 = tversky_loss(x2, y2)
    jax.block_until_ready(loss2)
    check(loss2, _reference_loss(x2, y2), 1e-5, "ragged")

    # 3) B=1 with a forced small block + 2-way core split: exercises multi-block
    #    accumulation, the masked last row block, and clamped phantom blocks.
    H3, W3 = 48, 48                      # S=2304 -> R=18 rows, rt=8 -> 3 row blocks
    x3 = jax.random.uniform(kx3, (1, C, H3, W3), dtype=jnp.float32)
    y3 = jax.random.randint(ky3, (1, H3, W3), 0, C, dtype=jnp.int32)
    loss3 = tversky_loss(x3, y3, block_bytes=8192, num_splits=2)
    jax.block_until_ready(loss3)
    check(loss3, _reference_loss(x3, y3), 1e-5, "split+masked")

    # 4) bf16 activations + int8 labels (reduced-HBM-traffic path).
    xb = x.astype(jnp.bfloat16)
    yb = y.astype(jnp.int8)
    loss4 = tversky_loss(xb, yb)
    jax.block_until_ready(loss4)
    check(loss4, _reference_loss(xb, yb), 1e-4, "bf16/int8")

    print("KERNEL_OK")
</pallas_src>

<mosaic_0001>
module attributes {stable_mosaic.version = 11 : i64} {
  func.func @_tversky_partials_kernel(%arg0: i32, %arg1: i32, %arg2: i32, %arg3: memref<1x4x2x128xf32, #tpu.memory_space<vmem>>, %arg4: memref<1x1x2x128xi32, #tpu.memory_space<vmem>>, %arg5: memref<1x1x4x1xf32, #tpu.memory_space<vmem>>, %arg6: memref<1x1x4x1xf32, #tpu.memory_space<vmem>>, %arg7: memref<1x1x4x1xf32, #tpu.memory_space<vmem>>) attributes {dimension_semantics = [#tpu.dimension_semantics<parallel>, #tpu.dimension_semantics<parallel>, #tpu.dimension_semantics<arbitrary>], iteration_bounds = array<i64: 2, 1, 1>, scalar_prefetch = 0 : i64, scratch_operands = 0 : i64, tpu.core_type = #tpu.core_type<tc>, window_params = [{transform_indices = @transform_0, window_bounds = array<i64: 1, 4, 2, 128>}, {transform_indices = @transform_1, window_bounds = array<i64: 1, 1, 2, 128>}, {transform_indices = @transform_2, window_bounds = array<i64: 1, 1, 4, 1>}, {transform_indices = @transform_3, window_bounds = array<i64: 1, 1, 4, 1>}, {transform_indices = @transform_4, window_bounds = array<i64: 1, 1, 4, 1>}]} {
    %c0_i32 = arith.constant 0 : i32
    %0 = arith.cmpi eq, %arg2, %c0_i32 : i32
    %1 = arith.extui %0 : i1 to i32
    %c0_i32_0 = arith.constant 0 : i32
    %2 = arith.cmpi ne, %1, %c0_i32_0 : i32
    scf.if %2 {
      %cst_149 = arith.constant 0.000000e+00 : f32
      %161 = vector.broadcast %cst_149 : f32 to vector<1x1x4x1xf32>
      %c0_150 = arith.constant 0 : index
      %c0_151 = arith.constant 0 : index
      %c0_152 = arith.constant 0 : index
      %c0_153 = arith.constant 0 : index
      %162 = vector.load %arg5[%c0_150, %c0_151, %c0_152, %c0_153] : memref<1x1x4x1xf32, #tpu.memory_space<vmem>>, vector<1x1x4x1xf32>
      tpu.vector_store %arg5[%c0_150, %c0_151, %c0_152, %c0_153], %161 {strides = array<i32>} : memref<1x1x4x1xf32, #tpu.memory_space<vmem>>, vector<1x1x4x1xf32>,
      %cst_154 = arith.constant 0.000000e+00 : f32
      %163 = vector.broadcast %cst_154 : f32 to vector<1x1x4x1xf32>
      %c0_155 = arith.constant 0 : index
      %c0_156 = arith.constant 0 : index
      %c0_157 = arith.constant 0 : index
      %c0_158 = arith.constant 0 : index
      %164 = vector.load %arg6[%c0_155, %c0_156, %c0_157, %c0_158] : memref<1x1x4x1xf32, #tpu.memory_space<vmem>>, vector<1x1x4x1xf32>
      tpu.vector_store %arg6[%c0_155, %c0_156, %c0_157, %c0_158], %163 {strides = array<i32>} : memref<1x1x4x1xf32, #tpu.memory_space<vmem>>, vector<1x1x4x1xf32>,
      %cst_159 = arith.constant 0.000000e+00 : f32
      %165 = vector.broadcast %cst_159 : f32 to vector<1x1x4x1xf32>
      %c0_160 = arith.constant 0 : index
      %c0_161 = arith.constant 0 : index
      %c0_162 = arith.constant 0 : index
      %c0_163 = arith.constant 0 : index
      %166 = vector.load %arg7[%c0_160, %c0_161, %c0_162, %c0_163] : memref<1x1x4x1xf32, #tpu.memory_space<vmem>>, vector<1x1x4x1xf32>
      tpu.vector_store %arg7[%c0_160, %c0_161, %c0_162, %c0_163], %165 {strides = array<i32>} : memref<1x1x4x1xf32, #tpu.memory_space<vmem>>, vector<1x1x4x1xf32>,
    } else {
    }
    %c0 = arith.constant 0 : index
    %c0_1 = arith.constant 0 : index
    %c0_2 = arith.constant 0 : index
    %c0_3 = arith.constant 0 : index
    %3 = vector.load %arg4[%c0, %c0_1, %c0_2, %c0_3] : memref<1x1x2x128xi32, #tpu.memory_space<vmem>>, vector<1x1x2x128xi32>
    %4 = vector.shape_cast %3 : vector<1x1x2x128xi32> to vector<2x128xi32>
    %c0_4 = arith.constant 0 : index
    %c0_5 = arith.constant 0 : index
    %c0_6 = arith.constant 0 : index
    %c0_7 = arith.constant 0 : index
    %5 = vector.load %arg3[%c0_4, %c0_5, %c0_6, %c0_7] : memref<1x4x2x128xf32, #tpu.memory_space<vmem>>, vector<1x1x2x128xf32>
    %6 = vector.shape_cast %5 : vector<1x1x2x128xf32> to vector<2x128xf32>
    %c0_i32_8 = arith.constant 0 : i32
    %7 = vector.broadcast %c0_i32_8 : i32 to vector<2x128xi32>
    %8 = arith.cmpi eq, %4, %7 : vector<2x128xi32>
    %c0_9 = arith.constant 0 : index
    %c0_10 = arith.constant 0 : index
    %c0_11 = arith.constant 0 : index
    %c0_12 = arith.constant 0 : index
    %9 = vector.load %arg5[%c0_9, %c0_10, %c0_11, %c0_12] : memref<1x1x4x1xf32, #tpu.memory_space<vmem>>, vector<1x1x1x1xf32>
    %10 = vector.shape_cast %9 : vector<1x1x1x1xf32> to vector<1x1xf32>
    %cst = arith.constant 0.000000e+00 : f32
    %11 = vector.broadcast %cst : f32 to vector<2x128xf32>
    %12 = arith.select %8, %6, %11 : vector<2x128xi1>, vector<2x128xf32>
    %cst_13 = arith.constant dense<0.000000e+00> : vector<128xf32>
    %13 = vector.multi_reduction <add>, %12, %cst_13 [0] : vector<2x128xf32> to vector<128xf32>
    %14 = vector.shape_cast %13 : vector<128xf32> to vector<1x128xf32>
    %cst_14 = arith.constant dense<0.000000e+00> : vector<1xf32>
    %15 = vector.multi_reduction <add>, %14, %cst_14 [1] : vector<1x128xf32> to vector<1xf32>
    %16 = vector.shape_cast %15 : vector<1xf32> to vector<1x1xf32>
    %17 = arith.addf %10, %16 : vector<1x1xf32>
    %c0_15 = arith.constant 0 : index
    %c0_16 = arith.constant 0 : index
    %c0_17 = arith.constant 0 : index
    %c0_18 = arith.constant 0 : index
    %18 = vector.load %arg5[%c0_15, %c0_16, %c0_17, %c0_18] : memref<1x1x4x1xf32, #tpu.memory_space<vmem>>, vector<1x1x1x1xf32>
    %19 = vector.shape_cast %18 : vector<1x1x1x1xf32> to vector<1x1xf32>
    %20 = vector.shape_cast %17 : vector<1x1xf32> to vector<1x1x1x1xf32>
    tpu.vector_store %arg5[%c0_15, %c0_16, %c0_17, %c0_18], %20 {strides = array<i32>} : memref<1x1x4x1xf32, #tpu.memory_space<vmem>>, vector<1x1x1x1xf32>,
    %c0_19 = arith.constant 0 : index
    %c0_20 = arith.constant 0 : index
    %c0_21 = arith.constant 0 : index
    %c0_22 = arith.constant 0 : index
    %21 = vector.load %arg6[%c0_19, %c0_20, %c0_21, %c0_22] : memref<1x1x4x1xf32, #tpu.memory_space<vmem>>, vector<1x1x1x1xf32>
    %22 = vector.shape_cast %21 : vector<1x1x1x1xf32> to vector<1x1xf32>
    %cst_23 = arith.constant dense<0.000000e+00> : vector<128xf32>
    %23 = vector.multi_reduction <add>, %6, %cst_23 [0] : vector<2x128xf32> to vector<128xf32>
    %24 = vector.shape_cast %23 : vector<128xf32> to vector<1x128xf32>
    %cst_24 = arith.constant dense<0.000000e+00> : vector<1xf32>
    %25 = vector.multi_reduction <add>, %24, %cst_24 [1] : vector<1x128xf32> to vector<1xf32>
    %26 = vector.shape_cast %25 : vector<1xf32> to vector<1x1xf32>
    %27 = arith.addf %22, %26 : vector<1x1xf32>
    %c0_25 = arith.constant 0 : index
    %c0_26 = arith.constant 0 : index
    %c0_27 = arith.constant 0 : index
    %c0_28 = arith.constant 0 : index
    %28 = vector.load %arg6[%c0_25, %c0_26, %c0_27, %c0_28] : memref<1x1x4x1xf32, #tpu.memory_space<vmem>>, vector<1x1x1x1xf32>
    %29 = vector.shape_cast %28 : vector<1x1x1x1xf32> to vector<1x1xf32>
    %30 = vector.shape_cast %27 : vector<1x1xf32> to vector<1x1x1x1xf32>
    tpu.vector_store %arg6[%c0_25, %c0_26, %c0_27, %c0_28], %30 {strides = array<i32>} : memref<1x1x4x1xf32, #tpu.memory_space<vmem>>, vector<1x1x1x1xf32>,
    %c0_29 = arith.constant 0 : index
    %c0_30 = arith.constant 0 : index
    %c0_31 = arith.constant 0 : index
    %c0_32 = arith.constant 0 : index
    %31 = vector.load %arg7[%c0_29, %c0_30, %c0_31, %c0_32] : memref<1x1x4x1xf32, #tpu.memory_space<vmem>>, vector<1x1x1x1xf32>
    %32 = vector.shape_cast %31 : vector<1x1x1x1xf32> to vector<1x1xf32>
    %cst_33 = arith.constant 1.000000e+00 : f32
    %cst_34 = arith.constant 0.000000e+00 : f32
    %33 = vector.broadcast %cst_33 : f32 to vector<2x128xf32>
    %34 = vector.broadcast %cst_34 : f32 to vector<2x128xf32>
    %35 = arith.select %8, %33, %34 : vector<2x128xi1>, vector<2x128xf32>
    %cst_35 = arith.constant dense<0.000000e+00> : vector<128xf32>
    %36 = vector.multi_reduction <add>, %35, %cst_35 [0] : vector<2x128xf32> to vector<128xf32>
    %37 = vector.shape_cast %36 : vector<128xf32> to vector<1x128xf32>
    %cst_36 = arith.constant dense<0.000000e+00> : vector<1xf32>
    %38 = vector.multi_reduction <add>, %37, %cst_36 [1] : vector<1x128xf32> to vector<1xf32>
    %39 = vector.shape_cast %38 : vector<1xf32> to vector<1x1xf32>
    %40 = arith.addf %32, %39 : vector<1x1xf32>
    %c0_37 = arith.constant 0 : index
    %c0_38 = arith.constant 0 : index
    %c0_39 = arith.constant 0 : index
    %c0_40 = arith.constant 0 : index
    %41 = vector.load %arg7[%c0_37, %c0_38, %c0_39, %c0_40] : memref<1x1x4x1xf32, #tpu.memory_space<vmem>>, vector<1x1x1x1xf32>
    %42 = vector.shape_cast %41 : vector<1x1x1x1xf32> to vector<1x1xf32>
    %43 = vector.shape_cast %40 : vector<1x1xf32> to vector<1x1x1x1xf32>
    tpu.vector_store %arg7[%c0_37, %c0_38, %c0_39, %c0_40], %43 {strides = array<i32>} : memref<1x1x4x1xf32, #tpu.memory_space<vmem>>, vector<1x1x1x1xf32>,
    %c0_41 = arith.constant 0 : index
    %c1 = arith.constant 1 : index
    %c0_42 = arith.constant 0 : index
    %c0_43 = arith.constant 0 : index
    %44 = vector.load %arg3[%c0_41, %c1, %c0_42, %c0_43] : memref<1x4x2x128xf32, #tpu.memory_space<vmem>>, vector<1x1x2x128xf32>
    %45 = vector.shape_cast %44 : vector<1x1x2x128xf32> to vector<2x128xf32>
    %c1_i32 = arith.constant 1 : i32
    %46 = vector.broadcast %c1_i32 : i32 to vector<2x128xi32>
    %47 = arith.cmpi eq, %4, %46 : vector<2x128xi32>
    %c0_44 = arith.constant 0 : index
    %c0_45 = arith.constant 0 : index
    %c1_46 = arith.constant 1 : index
    %c0_47 = arith.constant 0 : index
    %48 = vector.load %arg5[%c0_44, %c0_45, %c1_46, %c0_47] : memref<1x1x4x1xf32, #tpu.memory_space<vmem>>, vector<1x1x1x1xf32>
    %49 = vector.shape_cast %48 : vector<1x1x1x1xf32> to vector<1x1xf32>
    %cst_48 = arith.constant 0.000000e+00 : f32
    %50 = vector.broadcast %cst_48 : f32 to vector<2x128xf32>
    %51 = arith.select %47, %45, %50 : vector<2x128xi1>, vector<2x128xf32>
    %cst_49 = arith.constant dense<0.000000e+00> : vector<128xf32>
    %52 = vector.multi_reduction <add>, %51, %cst_49 [0] : vector<2x128xf32> to vector<128xf32>
    %53 = vector.shape_cast %52 : vector<128xf32> to vector<1x128xf32>
    %cst_50 = arith.constant dense<0.000000e+00> : vector<1xf32>
    %54 = vector.multi_reduction <add>, %53, %cst_50 [1] : vector<1x128xf32> to vector<1xf32>
    %55 = vector.shape_cast %54 : vector<1xf32> to vector<1x1xf32>
    %56 = arith.addf %49, %55 : vector<1x1xf32>
    %c0_51 = arith.constant 0 : index
    %c0_52 = arith.constant 0 : index
    %c1_53 = arith.constant 1 : index
    %c0_54 = arith.constant 0 : index
    %57 = vector.load %arg5[%c0_51, %c0_52, %c1_53, %c0_54] : memref<1x1x4x1xf32, #tpu.memory_space<vmem>>, vector<1x1x1x1xf32>
    %58 = vector.shape_cast %57 : vector<1x1x1x1xf32> to vector<1x1xf32>
    %59 = vector.shape_cast %56 : vector<1x1xf32> to vector<1x1x1x1xf32>
    tpu.vector_store %arg5[%c0_51, %c0_52, %c1_53, %c0_54], %59 {strides = array<i32>} : memref<1x1x4x1xf32, #tpu.memory_space<vmem>>, vector<1x1x1x1xf32>,
    %c0_55 = arith.constant 0 : index
    %c0_56 = arith.constant 0 : index
    %c1_57 = arith.constant 1 : index
    %c0_58 = arith.constant 0 : index
    %60 = vector.load %arg6[%c0_55, %c0_56, %c1_57, %c0_58] : memref<1x1x4x1xf32, #tpu.memory_space<vmem>>, vector<1x1x1x1xf32>
    %61 = vector.shape_cast %60 : vector<1x1x1x1xf32> to vector<1x1xf32>
    %cst_59 = arith.constant dense<0.000000e+00> : vector<128xf32>
    %62 = vector.multi_reduction <add>, %45, %cst_59 [0] : vector<2x128xf32> to vector<128xf32>
    %63 = vector.shape_cast %62 : vector<128xf32> to vector<1x128xf32>
    %cst_60 = arith.constant dense<0.000000e+00> : vector<1xf32>
    %64 = vector.multi_reduction <add>, %63, %cst_60 [1] : vector<1x128xf32> to vector<1xf32>
    %65 = vector.shape_cast %64 : vector<1xf32> to vector<1x1xf32>
    %66 = arith.addf %61, %65 : vector<1x1xf32>
    %c0_61 = arith.constant 0 : index
    %c0_62 = arith.constant 0 : index
    %c1_63 = arith.constant 1 : index
    %c0_64 = arith.constant 0 : index
    %67 = vector.load %arg6[%c0_61, %c0_62, %c1_63, %c0_64] : memref<1x1x4x1xf32, #tpu.memory_space<vmem>>, vector<1x1x1x1xf32>
    %68 = vector.shape_cast %67 : vector<1x1x1x1xf32> to vector<1x1xf32>
    %69 = vector.shape_cast %66 : vector<1x1xf32> to vector<1x1x1x1xf32>
    tpu.vector_store %arg6[%c0_61, %c0_62, %c1_63, %c0_64], %69 {strides = array<i32>} : memref<1x1x4x1xf32, #tpu.memory_space<vmem>>, vector<1x1x1x1xf32>,
    %c0_65 = arith.constant 0 : index
    %c0_66 = arith.constant 0 : index
    %c1_67 = arith.constant 1 : index
    %c0_68 = arith.constant 0 : index
    %70 = vector.load %arg7[%c0_65, %c0_66, %c1_67, %c0_68] : memref<1x1x4x1xf32, #tpu.memory_space<vmem>>, vector<1x1x1x1xf32>
    %71 = vector.shape_cast %70 : vector<1x1x1x1xf32> to vector<1x1xf32>
    %cst_69 = arith.constant 1.000000e+00 : f32
    %cst_70 = arith.constant 0.000000e+00 : f32
    %72 = vector.broadcast %cst_69 : f32 to vector<2x128xf32>
    %73 = vector.broadcast %cst_70 : f32 to vector<2x128xf32>
    %74 = arith.select %47, %72, %73 : vector<2x128xi1>, vector<2x128xf32>
    %cst_71 = arith.constant dense<0.000000e+00> : vector<128xf32>
    %75 = vector.multi_reduction <add>, %74, %cst_71 [0] : vector<2x128xf32> to vector<128xf32>
    %76 = vector.shape_cast %75 : vector<128xf32> to vector<1x128xf32>
    %cst_72 = arith.constant dense<0.000000e+00> : vector<1xf32>
    %77 = vector.multi_reduction <add>, %76, %cst_72 [1] : vector<1x128xf32> to vector<1xf32>
    %78 = vector.shape_cast %77 : vector<1xf32> to vector<1x1xf32>
    %79 = arith.addf %71, %78 : vector<1x1xf32>
    %c0_73 = arith.constant 0 : index
    %c0_74 = arith.constant 0 : index
    %c1_75 = arith.constant 1 : index
    %c0_76 = arith.constant 0 : index
    %80 = vector.load %arg7[%c0_73, %c0_74, %c1_75, %c0_76] : memref<1x1x4x1xf32, #tpu.memory_space<vmem>>, vector<1x1x1x1xf32>
    %81 = vector.shape_cast %80 : vector<1x1x1x1xf32> to vector<1x1xf32>
    %82 = vector.shape_cast %79 : vector<1x1xf32> to vector<1x1x1x1xf32>
    tpu.vector_store %arg7[%c0_73, %c0_74, %c1_75, %c0_76], %82 {strides = array<i32>} : memref<1x1x4x1xf32, #tpu.memory_space<vmem>>, vector<1x1x1x1xf32>,
    %c0_77 = arith.constant 0 : index
    %c2 = arith.constant 2 : index
    %c0_78 = arith.constant 0 : index
    %c0_79 = arith.constant 0 : index
    %83 = vector.load %arg3[%c0_77, %c2, %c0_78, %c0_79] : memref<1x4x2x128xf32, #tpu.memory_space<vmem>>, vector<1x1x2x128xf32>
    %84 = vector.shape_cast %83 : vector<1x1x2x128xf32> to vector<2x128xf32>
    %c2_i32 = arith.constant 2 : i32
    %85 = vector.broadcast %c2_i32 : i32 to vector<2x128xi32>
    %86 = arith.cmpi eq, %4, %85 : vector<2x128xi32>
    %c0_80 = arith.constant 0 : index
    %c0_81 = arith.constant 0 : index
    %c2_82 = arith.constant 2 : index
    %c0_83 = arith.constant 0 : index
    %87 = vector.load %arg5[%c0_80, %c0_81, %c2_82, %c0_83] : memref<1x1x4x1xf32, #tpu.memory_space<vmem>>, vector<1x1x1x1xf32>
    %88 = vector.shape_cast %87 : vector<1x1x1x1xf32> to vector<1x1xf32>
    %cst_84 = arith.constant 0.000000e+00 : f32
    %89 = vector.broadcast %cst_84 : f32 to vector<2x128xf32>
    %90 = arith.select %86, %84, %89 : vector<2x128xi1>, vector<2x128xf32>
    %cst_85 = arith.constant dense<0.000000e+00> : vector<128xf32>
    %91 = vector.multi_reduction <add>, %90, %cst_85 [0] : vector<2x128xf32> to vector<128xf32>
    %92 = vector.shape_cast %91 : vector<128xf32> to vector<1x128xf32>
    %cst_86 = arith.constant dense<0.000000e+00> : vector<1xf32>
    %93 = vector.multi_reduction <add>, %92, %cst_86 [1] : vector<1x128xf32> to vector<1xf32>
    %94 = vector.shape_cast %93 : vector<1xf32> to vector<1x1xf32>
    %95 = arith.addf %88, %94 : vector<1x1xf32>
    %c0_87 = arith.constant 0 : index
    %c0_88 = arith.constant 0 : index
    %c2_89 = arith.constant 2 : index
    %c0_90 = arith.constant 0 : index
    %96 = vector.load %arg5[%c0_87, %c0_88, %c2_89, %c0_90] : memref<1x1x4x1xf32, #tpu.memory_space<vmem>>, vector<1x1x1x1xf32>
    %97 = vector.shape_cast %96 : vector<1x1x1x1xf32> to vector<1x1xf32>
    %98 = vector.shape_cast %95 : vector<1x1xf32> to vector<1x1x1x1xf32>
    tpu.vector_store %arg5[%c0_87, %c0_88, %c2_89, %c0_90], %98 {strides = array<i32>} : memref<1x1x4x1xf32, #tpu.memory_space<vmem>>, vector<1x1x1x1xf32>,
    %c0_91 = arith.constant 0 : index
    %c0_92 = arith.constant 0 : index
    %c2_93 = arith.constant 2 : index
    %c0_94 = arith.constant 0 : index
    %99 = vector.load %arg6[%c0_91, %c0_92, %c2_93, %c0_94] : memref<1x1x4x1xf32, #tpu.memory_space<vmem>>, vector<1x1x1x1xf32>
    %100 = vector.shape_cast %99 : vector<1x1x1x1xf32> to vector<1x1xf32>
    %cst_95 = arith.constant dense<0.000000e+00> : vector<128xf32>
    %101 = vector.multi_reduction <add>, %84, %cst_95 [0] : vector<2x128xf32> to vector<128xf32>
    %102 = vector.shape_cast %101 : vector<128xf32> to vector<1x128xf32>
    %cst_96 = arith.constant dense<0.000000e+00> : vector<1xf32>
    %103 = vector.multi_reduction <add>, %102, %cst_96 [1] : vector<1x128xf32> to vector<1xf32>
    %104 = vector.shape_cast %103 : vector<1xf32> to vector<1x1xf32>
    %105 = arith.addf %100, %104 : vector<1x1xf32>
    %c0_97 = arith.constant 0 : index
    %c0_98 = arith.constant 0 : index
    %c2_99 = arith.constant 2 : index
    %c0_100 = arith.constant 0 : index
    %106 = vector.load %arg6[%c0_97, %c0_98, %c2_99, %c0_100] : memref<1x1x4x1xf32, #tpu.memory_space<vmem>>, vector<1x1x1x1xf32>
    %107 = vector.shape_cast %106 : vector<1x1x1x1xf32> to vector<1x1xf32>
    %108 = vector.shape_cast %105 : vector<1x1xf32> to vector<1x1x1x1xf32>
    tpu.vector_store %arg6[%c0_97, %c0_98, %c2_99, %c0_100], %108 {strides = array<i32>} : memref<1x1x4x1xf32, #tpu.memory_space<vmem>>, vector<1x1x1x1xf32>,
    %c0_101 = arith.constant 0 : index
    %c0_102 = arith.constant 0 : index
    %c2_103 = arith.constant 2 : index
    %c0_104 = arith.constant 0 : index
    %109 = vector.load %arg7[%c0_101, %c0_102, %c2_103, %c0_104] : memref<1x1x4x1xf32, #tpu.memory_space<vmem>>, vector<1x1x1x1xf32>
    %110 = vector.shape_cast %109 : vector<1x1x1x1xf32> to vector<1x1xf32>
    %cst_105 = arith.constant 1.000000e+00 : f32
    %cst_106 = arith.constant 0.000000e+00 : f32
    %111 = vector.broadcast %cst_105 : f32 to vector<2x128xf32>
    %112 = vector.broadcast %cst_106 : f32 to vector<2x128xf32>
    %113 = arith.select %86, %111, %112 : vector<2x128xi1>, vector<2x128xf32>
    %cst_107 = arith.constant dense<0.000000e+00> : vector<128xf32>
    %114 = vector.multi_reduction <add>, %113, %cst_107 [0] : vector<2x128xf32> to vector<128xf32>
    %115 = vector.shape_cast %114 : vector<128xf32> to vector<1x128xf32>
    %cst_108 = arith.constant dense<0.000000e+00> : vector<1xf32>
    %116 = vector.multi_reduction <add>, %115, %cst_108 [1] : vector<1x128xf32> to vector<1xf32>
    %117 = vector.shape_cast %116 : vector<1xf32> to vector<1x1xf32>
    %118 = arith.addf %110, %117 : vector<1x1xf32>
    %c0_109 = arith.constant 0 : index
    %c0_110 = arith.constant 0 : index
    %c2_111 = arith.constant 2 : index
    %c0_112 = arith.constant 0 : index
    %119 = vector.load %arg7[%c0_109, %c0_110, %c2_111, %c0_112] : memref<1x1x4x1xf32, #tpu.memory_space<vmem>>, vector<1x1x1x1xf32>
    %120 = vector.shape_cast %119 : vector<1x1x1x1xf32> to vector<1x1xf32>
    %121 = vector.shape_cast %118 : vector<1x1xf32> to vector<1x1x1x1xf32>
    tpu.vector_store %arg7[%c0_109, %c0_110, %c2_111, %c0_112], %121 {strides = array<i32>} : memref<1x1x4x1xf32, #tpu.memory_space<vmem>>, vector<1x1x1x1xf32>,
    %c0_113 = arith.constant 0 : index
    %c3 = arith.constant 3 : index
    %c0_114 = arith.constant 0 : index
    %c0_115 = arith.constant 0 : index
    %122 = vector.load %arg3[%c0_113, %c3, %c0_114, %c0_115] : memref<1x4x2x128xf32, #tpu.memory_space<vmem>>, vector<1x1x2x128xf32>
    %123 = vector.shape_cast %122 : vector<1x1x2x128xf32> to vector<2x128xf32>
    %c3_i32 = arith.constant 3 : i32
    %124 = vector.broadcast %c3_i32 : i32 to vector<2x128xi32>
    %125 = arith.cmpi eq, %4, %124 : vector<2x128xi32>
    %c0_116 = arith.constant 0 : index
    %c0_117 = arith.constant 0 : index
    %c3_118 = arith.constant 3 : index
    %c0_119 = arith.constant 0 : index
    %126 = vector.load %arg5[%c0_116, %c0_117, %c3_118, %c0_119] : memref<1x1x4x1xf32, #tpu.memory_space<vmem>>, vector<1x1x1x1xf32>
    %127 = vector.shape_cast %126 : vector<1x1x1x1xf32> to vector<1x1xf32>
    %cst_120 = arith.constant 0.000000e+00 : f32
    %128 = vector.broadcast %cst_120 : f32 to vector<2x128xf32>
    %129 = arith.select %125, %123, %128 : vector<2x128xi1>, vector<2x128xf32>
    %cst_121 = arith.constant dense<0.000000e+00> : vector<128xf32>
    %130 = vector.multi_reduction <add>, %129, %cst_121 [0] : vector<2x128xf32> to vector<128xf32>
    %131 = vector.shape_cast %130 : vector<128xf32> to vector<1x128xf32>
    %cst_122 = arith.constant dense<0.000000e+00> : vector<1xf32>
    %132 = vector.multi_reduction <add>, %131, %cst_122 [1] : vector<1x128xf32> to vector<1xf32>
    %133 = vector.shape_cast %132 : vector<1xf32> to vector<1x1xf32>
    %134 = arith.addf %127, %133 : vector<1x1xf32>
    %c0_123 = arith.constant 0 : index
    %c0_124 = arith.constant 0 : index
    %c3_125 = arith.constant 3 : index
    %c0_126 = arith.constant 0 : index
    %135 = vector.load %arg5[%c0_123, %c0_124, %c3_125, %c0_126] : memref<1x1x4x1xf32, #tpu.memory_space<vmem>>, vector<1x1x1x1xf32>
    %136 = vector.shape_cast %135 : vector<1x1x1x1xf32> to vector<1x1xf32>
    %137 = vector.shape_cast %134 : vector<1x1xf32> to vector<1x1x1x1xf32>
    tpu.vector_store %arg5[%c0_123, %c0_124, %c3_125, %c0_126], %137 {strides = array<i32>} : memref<1x1x4x1xf32, #tpu.memory_space<vmem>>, vector<1x1x1x1xf32>,
    %c0_127 = arith.constant 0 : index
    %c0_128 = arith.constant 0 : index
    %c3_129 = arith.constant 3 : index
    %c0_130 = arith.constant 0 : index
    %138 = vector.load %arg6[%c0_127, %c0_128, %c3_129, %c0_130] : memref<1x1x4x1xf32, #tpu.memory_space<vmem>>, vector<1x1x1x1xf32>
    %139 = vector.shape_cast %138 : vector<1x1x1x1xf32> to vector<1x1xf32>
    %cst_131 = arith.constant dense<0.000000e+00> : vector<128xf32>
    %140 = vector.multi_reduction <add>, %123, %cst_131 [0] : vector<2x128xf32> to vector<128xf32>
    %141 = vector.shape_cast %140 : vector<128xf32> to vector<1x128xf32>
    %cst_132 = arith.constant dense<0.000000e+00> : vector<1xf32>
    %142 = vector.multi_reduction <add>, %141, %cst_132 [1] : vector<1x128xf32> to vector<1xf32>
    %143 = vector.shape_cast %142 : vector<1xf32> to vector<1x1xf32>
    %144 = arith.addf %139, %143 : vector<1x1xf32>
    %c0_133 = arith.constant 0 : index
    %c0_134 = arith.constant 0 : index
    %c3_135 = arith.constant 3 : index
    %c0_136 = arith.constant 0 : index
    %145 = vector.load %arg6[%c0_133, %c0_134, %c3_135, %c0_136] : memref<1x1x4x1xf32, #tpu.memory_space<vmem>>, vector<1x1x1x1xf32>
    %146 = vector.shape_cast %145 : vector<1x1x1x1xf32> to vector<1x1xf32>
    %147 = vector.shape_cast %144 : vector<1x1xf32> to vector<1x1x1x1xf32>
    tpu.vector_store %arg6[%c0_133, %c0_134, %c3_135, %c0_136], %147 {strides = array<i32>} : memref<1x1x4x1xf32, #tpu.memory_space<vmem>>, vector<1x1x1x1xf32>,
    %c0_137 = arith.constant 0 : index
    %c0_138 = arith.constant 0 : index
    %c3_139 = arith.constant 3 : index
    %c0_140 = arith.constant 0 : index
    %148 = vector.load %arg7[%c0_137, %c0_138, %c3_139, %c0_140] : memref<1x1x4x1xf32, #tpu.memory_space<vmem>>, vector<1x1x1x1xf32>
    %149 = vector.shape_cast %148 : vector<1x1x1x1xf32> to vector<1x1xf32>
    %cst_141 = arith.constant 1.000000e+00 : f32
    %cst_142 = arith.constant 0.000000e+00 : f32
    %150 = vector.broadcast %cst_141 : f32 to vector<2x128xf32>
    %151 = vector.broadcast %cst_142 : f32 to vector<2x128xf32>
    %152 = arith.select %125, %150, %151 : vector<2x128xi1>, vector<2x128xf32>
    %cst_143 = arith.constant dense<0.000000e+00> : vector<128xf32>
    %153 = vector.multi_reduction <add>, %152, %cst_143 [0] : vector<2x128xf32> to vector<128xf32>
    %154 = vector.shape_cast %153 : vector<128xf32> to vector<1x128xf32>
    %cst_144 = arith.constant dense<0.000000e+00> : vector<1xf32>
    %155 = vector.multi_reduction <add>, %154, %cst_144 [1] : vector<1x128xf32> to vector<1xf32>
    %156 = vector.shape_cast %155 : vector<1xf32> to vector<1x1xf32>
    %157 = arith.addf %149, %156 : vector<1x1xf32>
    %c0_145 = arith.constant 0 : index
    %c0_146 = arith.constant 0 : index
    %c3_147 = arith.constant 3 : index
    %c0_148 = arith.constant 0 : index
    %158 = vector.load %arg7[%c0_145, %c0_146, %c3_147, %c0_148] : memref<1x1x4x1xf32, #tpu.memory_space<vmem>>, vector<1x1x1x1xf32>
    %159 = vector.shape_cast %158 : vector<1x1x1x1xf32> to vector<1x1xf32>
    %160 = vector.shape_cast %157 : vector<1x1xf32> to vector<1x1x1x1xf32>
    tpu.vector_store %arg7[%c0_145, %c0_146, %c3_147, %c0_148], %160 {strides = array<i32>} : memref<1x1x4x1xf32, #tpu.memory_space<vmem>>, vector<1x1x1x1xf32>,
    return
  }
  func.func @transform_0(%arg0: i32, %arg1: i32, %arg2: i32) -> (i32, i32, i32, i32) {
    %c1_i32 = arith.constant 1 : i32
    %0 = arith.muli %arg1, %c1_i32 : i32
    %1 = arith.addi %0, %arg2 : i32
    %c0_i32 = arith.constant 0 : i32
    %c0_i32_0 = arith.constant 0 : i32
    %c0_i32_1 = arith.constant 0 : i32
    return %arg0, %c0_i32, %1, %c0_i32_0 : i32, i32, i32, i32
  }
  func.func @transform_1(%arg0: i32, %arg1: i32, %arg2: i32) -> (i32, i32, i32, i32) {
    %c1_i32 = arith.constant 1 : i32
    %0 = arith.muli %arg1, %c1_i32 : i32
    %1 = arith.addi %0, %arg2 : i32
    %c0_i32 = arith.constant 0 : i32
    %c0_i32_0 = arith.constant 0 : i32
    %c0_i32_1 = arith.constant 0 : i32
    return %arg0, %c0_i32, %1, %c0_i32_0 : i32, i32, i32, i32
  }
  func.func @transform_2(%arg0: i32, %arg1: i32, %arg2: i32) -> (i32, i32, i32, i32) {
    %c0_i32 = arith.constant 0 : i32
    %c0_i32_0 = arith.constant 0 : i32
    %c0_i32_1 = arith.constant 0 : i32
    return %arg0, %arg1, %c0_i32, %c0_i32_0 : i32, i32, i32, i32
  }
  func.func @transform_3(%arg0: i32, %arg1: i32, %arg2: i32) -> (i32, i32, i32, i32) {
    %c0_i32 = arith.constant 0 : i32
    %c0_i32_0 = arith.constant 0 : i32
    %c0_i32_1 = arith.constant 0 : i32
    return %arg0, %arg1, %c0_i32, %c0_i32_0 : i32, i32, i32, i32
  }
  func.func @transform_4(%arg0: i32, %arg1: i32, %arg2: i32) -> (i32, i32, i32, i32) {
    %c0_i32 = arith.constant 0 : i32
    %c0_i32_0 = arith.constant 0 : i32
    %c0_i32_1 = arith.constant 0 : i32
    return %arg0, %arg1, %c0_i32, %c0_i32_0 : i32, i32, i32, i32
  }
}

</mosaic_0001>

<llo_original>
// kernel: tpu_custom_call.1
$region0: #{tpu_custom_call.1}
  #allocation0 [shape = 'u32[]', space=smem, size = 0x4, offset = 0x4, fixed_abs, tag = 'smem constant byte address 0x4 - core index']
  #allocation1 [shape = 'u32[144,128]{1,0:T(1,128)}', space=vmem, size = 0x12000, scoped, tag = 'internal scratch']
  %s0 = inlined_call_operand.hbm [shape: f32[2,4,2,128], index: 0, kind: input, shape index: {}]
  %s1 = inlined_call_operand.hbm [shape: s32[2,1,2,128], index: 1, kind: input, shape index: {}]
  %s2 = inlined_call_operand.vmem [shape: f32[2,1,4,1], index: 2, kind: output, shape index: {0}]
  %s3 = inlined_call_operand.vmem [shape: f32[2,1,4,1], index: 3, kind: output, shape index: {1}]
  %s4 = inlined_call_operand.vmem [shape: f32[2,1,4,1], index: 4, kind: output, shape index: {2}]
  %5 = xla_tuple %s2, %s3, %s4
  %s6 = sld [smem:[#allocation0]]
  $region69: #{tpu_custom_call.1} parent=0
    _
  %s8 = ssub.s32 1, %s6
  %s9 = scalar_select 0, %s8, %s6
  $region1: #{tpu_custom_call.1} parent=0
    #allocation2 [shape = 'u8[8192]{0}', space=vmem, size = 0x2000, scoped, tag = 'input window, operand 0']
    #allocation3 [shape = 's32[2]{0}', space=sflag, size = 0x8, scoped, tag = 'scoped memory for tpu_custom_call.1']
    #allocation4 [shape = 'u8[2048]{0}', space=vmem, size = 0x800, scoped, tag = 'input window, operand 1']
    #allocation5 [shape = 's32[2]{0}', space=sflag, size = 0x8, scoped, tag = 'scoped memory for tpu_custom_call.1']
    %10 = vsyncpa [#allocation3], 0
    %s11 = scalar_lea.sflag [#allocation3], 1
    %12 = vsyncpa %s11, 0
    %13 = vsyncpa [#allocation5], 0
    %s14 = scalar_lea.sflag [#allocation5], 1
    %15 = vsyncpa %s14, 0
    loop: start=0, step=1, limit=4
    $region2: #{tpu_custom_call.1} parent=1 // loop_pre_header
      _
    $region3: #{tpu_custom_call.1} parent=1 // loop_header
      %s17 = sphi 0, %s21
      %p18 = scmp.ge.s32.totalorder %s17, 4
      %s24 = sphi 0, %s43
      %s25 = sphi 0, %s39
      %s26 = sphi 0, %s35
      %s27 = sphi 0, %s24
      %s28 = sphi 0, %s25
      %s29 = sphi 0, %s26
      %s30 = sphi 0, %s27
      %s31 = sphi 0, %s28
      %s32 = sphi 0, %s29
      %s50 = sphi 0, %s52
      %s53 = sphi 0, %s50
      %s54 = sphi 0, %s53
      %s70 = sphi 0, %s54
      %s80 = sphi 0, %s82
      %s83 = sphi 0, %s80
      %s84 = sphi 0, %s83
      %s100 = sphi 0, %s84
      %s108 = sphi 0, %s110
      %s111 = sphi 0, %s108
      %s112 = sphi 0, %s111
      %s128 = sphi 0, %s112
      %s136 = sphi 0, %s138
      %s139 = sphi 0, %s136
      %s140 = sphi 0, %s139
      %s156 = sphi 0, %s140
      %s164 = sphi 0, %s166
      %s167 = sphi 0, %s164
      %s168 = sphi 0, %s167
      %s184 = sphi 0, %s168
    $region4: #{tpu_custom_call.1} parent=1 // loop_header_branch
      %20 = sbr.rel (%p18) target = $region8
    $region5: #{tpu_custom_call.1} parent=1 // loop_body
      %s22 = ssub.s32 %s17, 1
      %s23 = ssub.s32 %s17, 2
      %s33 = sadd.s32 1, %s26
      %p34 = scmp.ge.s32.totalorder %s33, 1
      %s35 = scalar_select %p34, 0, %s33
      %s36 = sadd.s32 1, %s25
      %s37 = scalar_select %p34, %s36, %s25
      %p38 = scmp.ge.s32.totalorder %s37, 1
      %s39 = scalar_select %p38, 0, %s37
      %s40 = sadd.s32 1, %s24
      %s41 = scalar_select %p38, %s40, %s24
      %p42 = scmp.ge.s32.totalorder %s41, 2
      %s43 = scalar_select %p42, 0, %s41
      %s44 = sadd.s32 %s25, %s26
      %s45 = sadd.s32 %s39, %s35
      %s46 = ssub.s32 %s24, %s43
      %s47 = ssub.s32 %s44, %s45
      %s48 = sor.u32 %s46, %s47
      %p49 = scmp.eq.s32.totalorder %s48, 0
      %s51 = sadd.s32 %s50, 1
      %s52 = scalar_select %p49, %s50, %s51
      %p55 = pneg %p49
      %p56 = scmp.eq.s32.totalorder %s17, 1
      %p57 = por %p55, %p56
      %p58 = scmp.ne.s32.totalorder %s50, %s53
      %p59 = scmp.eq.s32.totalorder %s17, 0
      %p60 = por %p58, %p59
      %p61 = scmp.ne.s32.totalorder %s50, %s53
      %p62 = scmp.eq.s32.totalorder %s22, 1
      %p63 = por %p61, %p62
      %p64 = scmp.ne.s32.totalorder %s53, %s54
      %p65 = scmp.eq.s32.totalorder %s22, 0
      %p66 = por %p64, %p65
      %p67 = scmp.ne.s32.totalorder %s53, %s54
      %p68 = scmp.eq.s32.totalorder %s23, 1
      %p69 = por %p67, %p68
      %p71 = scmp.ne.s32.totalorder %s54, %s70
      %p72 = scmp.eq.s32.totalorder %s23, 0
      %p73 = por %p71, %p72
      %s74 = sadd.s32 %s25, %s26
      %s75 = sadd.s32 %s39, %s35
      %s76 = ssub.s32 %s24, %s43
      %s77 = ssub.s32 %s74, %s75
      %s78 = sor.u32 %s76, %s77
      %p79 = scmp.eq.s32.totalorder %s78, 0
      %s81 = sadd.s32 %s80, 1
      %s82 = scalar_select %p79, %s80, %s81
      %p85 = pneg %p79
      %p86 = scmp.eq.s32.totalorder %s17, 1
      %p87 = por %p85, %p86
      %p88 = scmp.ne.s32.totalorder %s80, %s83
      %p89 = scmp.eq.s32.totalorder %s17, 0
      %p90 = por %p88, %p89
      %p91 = scmp.ne.s32.totalorder %s80, %s83
      %p92 = scmp.eq.s32.totalorder %s22, 1
      %p93 = por %p91, %p92
      %p94 = scmp.ne.s32.totalorder %s83, %s84
      %p95 = scmp.eq.s32.totalorder %s22, 0
      %p96 = por %p94, %p95
      %p97 = scmp.ne.s32.totalorder %s83, %s84
      %p98 = scmp.eq.s32.totalorder %s23, 1
      %p99 = por %p97, %p98
      %p101 = scmp.ne.s32.totalorder %s84, %s100
      %p102 = scmp.eq.s32.totalorder %s23, 0
      %p103 = por %p101, %p102
      %s104 = ssub.s32 %s24, %s43
      %s105 = ssub.s32 %s25, %s39
      %s106 = sor.u32 %s104, %s105
      %p107 = scmp.eq.s32.totalorder %s106, 0
      %s109 = sadd.s32 %s108, 1
      %s110 = scalar_select %p107, %s108, %s109
      %p113 = pneg %p107
      %p114 = scmp.eq.s32.totalorder %s17, 1
      %p115 = por %p113, %p114
      %p116 = scmp.ne.s32.totalorder %s108, %s111
      %p117 = scmp.eq.s32.totalorder %s17, 0
      %p118 = por %p116, %p117
      %p119 = scmp.ne.s32.totalorder %s108, %s111
      %p120 = scmp.eq.s32.totalorder %s22, 1
      %p121 = por %p119, %p120
      %p122 = scmp.ne.s32.totalorder %s111, %s112
      %p123 = scmp.eq.s32.totalorder %s22, 0
      %p124 = por %p122, %p123
      %p125 = scmp.ne.s32.totalorder %s111, %s112
      %p126 = scmp.eq.s32.totalorder %s23, 1
      %p127 = por %p125, %p126
      %p129 = scmp.ne.s32.totalorder %s112, %s128
      %p130 = scmp.eq.s32.totalorder %s23, 0
      %p131 = por %p129, %p130
      %s132 = ssub.s32 %s24, %s43
      %s133 = ssub.s32 %s25, %s39
      %s134 = sor.u32 %s132, %s133
      %p135 = scmp.eq.s32.totalorder %s134, 0
      %s137 = sadd.s32 %s136, 1
      %s138 = scalar_select %p135, %s136, %s137
      %p141 = pneg %p135
      %p142 = scmp.eq.s32.totalorder %s17, 1
      %p143 = por %p141, %p142
      %p144 = scmp.ne.s32.totalorder %s136, %s139
      %p145 = scmp.eq.s32.totalorder %s17, 0
      %p146 = por %p144, %p145
      %p147 = scmp.ne.s32.totalorder %s136, %s139
      %p148 = scmp.eq.s32.totalorder %s22, 1
      %p149 = por %p147, %p148
      %p150 = scmp.ne.s32.totalorder %s139, %s140
      %p151 = scmp.eq.s32.totalorder %s22, 0
      %p152 = por %p150, %p151
      %p153 = scmp.ne.s32.totalorder %s139, %s140
      %p154 = scmp.eq.s32.totalorder %s23, 1
      %p155 = por %p153, %p154
      %p157 = scmp.ne.s32.totalorder %s140, %s156
      %p158 = scmp.eq.s32.totalorder %s23, 0
      %p159 = por %p157, %p158
      %s160 = ssub.s32 %s24, %s43
      %s161 = ssub.s32 %s25, %s39
      %s162 = sor.u32 %s160, %s161
      %p163 = scmp.eq.s32.totalorder %s162, 0
      %s165 = sadd.s32 %s164, 1
      %s166 = scalar_select %p163, %s164, %s165
      %p169 = pneg %p163
      %p170 = scmp.eq.s32.totalorder %s17, 1
      %p171 = por %p169, %p170
      %p172 = scmp.ne.s32.totalorder %s164, %s167
      %p173 = scmp.eq.s32.totalorder %s17, 0
      %p174 = por %p172, %p173
      %p175 = scmp.ne.s32.totalorder %s164, %s167
      %p176 = scmp.eq.s32.totalorder %s22, 1
      %p177 = por %p175, %p176
      %p178 = scmp.ne.s32.totalorder %s167, %s168
      %p179 = scmp.eq.s32.totalorder %s22, 0
      %p180 = por %p178, %p179
      %p181 = scmp.ne.s32.totalorder %s167, %s168
      %p182 = scmp.eq.s32.totalorder %s23, 1
      %p183 = por %p181, %p182
      %p185 = scmp.ne.s32.totalorder %s168, %s184
      %p186 = scmp.eq.s32.totalorder %s23, 0
      %p187 = por %p185, %p186
      %p188 = scmp.le.s32.totalorder 1, %s17
      %p189 = scmp.lt.s32.totalorder %s17, 3
      %p190 = pnand %p188, %p189
      %p191 = pneg %p190
      // Predicated region
      $region9: #{tpu_custom_call.1} parent=5 // pred_check
        _
      $region10: #{tpu_custom_call.1} parent=5 // pred_check_branch
        %193 = sbr.rel (%p190) target = $region12
      $region11: #{tpu_custom_call.1} parent=5 // pred_region
        %s194 = ssub.s32 %s17, 1
      $region12: #{tpu_custom_call.1} parent=5 // pred_fallthru
        _
      %p195 = scmp.lt.s32.totalorder %s17, 2
      // Predicated region
      $region13: #{tpu_custom_call.1} parent=5 // pred_check
        %p196 = pneg %p195
      $region14: #{tpu_custom_call.1} parent=5 // pred_check_branch
        %198 = sbr.rel (%p196) target = $region16
      $region15: #{tpu_custom_call.1} parent=5 // pred_region
        // Predicated region
        $region17: #{tpu_custom_call.1} parent=15 // pred_check
          %p199 = pneg %p60
        $region18: #{tpu_custom_call.1} parent=15 // pred_check_branch
          %201 = sbr.rel (%p199) target = $region20
        $region19: #{tpu_custom_call.1} parent=15 // pred_region
          %s202 = sand.u32 %s50, 1
          %s203 = scalar_lea.sflag [#allocation3], %s202
          %s204 = sand.u32 %s50, 1
          %s205 = smul.addr %s204, 8
          %s206 = scalar_lea.vmem [#allocation2], %s205
          %s207 = sadd.s32 %s25, %s26
          %s209 = ssub.s32 128, 128
          %210 = vsyncadd %s203, %s209
          %s211 = smul.addr %s24, 4
          %s212 = sadd.s32 %s207, %s211
          %s213 = smul.addr %s212, 32
          %s214 = scalar_lea.hbm %s0, %s213
          %s215 = sshll.u32 %s206, 4
          %s216 = int_to_ptr.vmem [resolvable:$true] %s215
          %221 = dma.hbm_to_vmem [thread:$0]  %s214, 128, %s216, %s203, 32, 32, 2
        $region20: #{tpu_custom_call.1} parent=15 // pred_fallthru
          _
        // Predicated region
        $region21: #{tpu_custom_call.1} parent=15 // pred_check
          %p222 = pneg %p90
        $region22: #{tpu_custom_call.1} parent=15 // pred_check_branch
          %224 = sbr.rel (%p222) target = $region24
        $region23: #{tpu_custom_call.1} parent=15 // pred_region
          %s225 = sand.u32 %s80, 1
          %s226 = scalar_lea.sflag [#allocation5], %s225
          %s227 = sand.u32 %s80, 1
          %s228 = smul.addr %s227, 2
          %s229 = scalar_lea.vmem [#allocation4], %s228
          %s230 = sadd.s32 %s25, %s26
          %s232 = ssub.s32 32, 32
          %233 = vsyncadd %s226, %s232
          %s234 = sadd.s32 %s230, %s24
          %s235 = smul.addr %s234, 32
          %s236 = scalar_lea.hbm %s1, %s235
          %s238 = sshll.u32 %s229, 4
          %s239 = int_to_ptr.vmem [resolvable:$true] %s238
          %241 = dma.hbm_to_vmem [thread:$0]  %s236, 32, %s239, %s226
        $region24: #{tpu_custom_call.1} parent=15 // pred_fallthru
          _
      $region16: #{tpu_custom_call.1} parent=5 // pred_fallthru
        _
      %p242 = scmp.le.s32.totalorder 1, %s17
      %p243 = scmp.lt.s32.totalorder %s17, 3
      %p244 = pnand %p242, %p243
      %p245 = pneg %p244
      // Predicated region
      $region25: #{tpu_custom_call.1} parent=5 // pred_check
        _
      $region26: #{tpu_custom_call.1} parent=5 // pred_check_branch
        %247 = sbr.rel (%p244) target = $region28
      $region27: #{tpu_custom_call.1} parent=5 // pred_region
        %s248 = ssub.s32 %s17, 1
        %s249 = sand.u32 %s53, 1
        %s250 = scalar_lea.sflag [#allocation3], %s249
        %s251 = sand.u32 %s53, 1
        %s252 = smul.addr %s251, 8
        %s253 = scalar_lea.vmem [#allocation2], %s252
        // Predicated region
        $region29: #{tpu_custom_call.1} parent=27 // pred_check
          %p254 = pneg %p66
        $region30: #{tpu_custom_call.1} parent=27 // pred_check_branch
          %256 = sbr.rel (%p254) target = $region32
        $region31: #{tpu_custom_call.1} parent=27 // pred_region
          %257 = dma.done %s250, 128
        $region32: #{tpu_custom_call.1} parent=27 // pred_fallthru
          _
        %s258 = sand.u32 %s83, 1
        %s259 = scalar_lea.sflag [#allocation5], %s258
        %s260 = sand.u32 %s83, 1
        %s261 = smul.addr %s260, 2
        %s262 = scalar_lea.vmem [#allocation4], %s261
        // Predicated region
        $region33: #{tpu_custom_call.1} parent=27 // pred_check
          %p263 = pneg %p96
        $region34: #{tpu_custom_call.1} parent=27 // pred_check_branch
          %265 = sbr.rel (%p263) target = $region36
        $region35: #{tpu_custom_call.1} parent=27 // pred_region
          %266 = dma.done %s259, 32
        $region36: #{tpu_custom_call.1} parent=27 // pred_fallthru
          _
        %s267 = sand.u32 %s53, 1
        %s268 = scalar_lea.sflag [#allocation3], %s267
        %s269 = sand.u32 %s53, 1
        %s270 = smul.addr %s269, 8
        %s271 = scalar_lea.vmem [#allocation2], %s270
        %p272 = pneg %p66
        %p273 = pneg %p63
        %s274 = sand.u32 %s83, 1
        %s275 = scalar_lea.sflag [#allocation5], %s274
        %s276 = sand.u32 %s83, 1
        %s277 = smul.addr %s276, 2
        %s278 = scalar_lea.vmem [#allocation4], %s277
        %p279 = pneg %p96
        %p280 = pneg %p93
        %p281 = pneg %p124
        %p282 = pneg %p121
        %p283 = scmp.lt.s32.totalorder %s27, 1
        %s284 = scalar_select %p283, %s27, 1
        %p285 = scmp.lt.s32.totalorder %s28, 0
        %s286 = scalar_select %p285, %s28, 0
        %s287 = sadd.s32 %s286, %s284
        %s288 = smul.addr %s287, 4
        %s289 = scalar_lea.vmem %s2, %s288
        %p290 = pneg %p152
        %p291 = pneg %p149
        %p292 = scmp.lt.s32.totalorder %s27, 1
        %s293 = scalar_select %p292, %s27, 1
        %p294 = scmp.lt.s32.totalorder %s28, 0
        %s295 = scalar_select %p294, %s28, 0
        %s296 = sadd.s32 %s295, %s293
        %s297 = smul.addr %s296, 4
        %s298 = scalar_lea.vmem %s3, %s297
        %p299 = pneg %p180
        %p300 = pneg %p177
        %p301 = scmp.lt.s32.totalorder %s27, 1
        %s302 = scalar_select %p301, %s27, 1
        %p303 = scmp.lt.s32.totalorder %s28, 0
        %s304 = scalar_select %p303, %s28, 0
        %s305 = sadd.s32 %s304, %s302
        %s306 = smul.addr %s305, 4
        %s307 = scalar_lea.vmem %s4, %s306
        %s308 = sadd.s32 %s28, %s29
        %s309 = sadd.s32 %s28, %s29
        %p310 = scmp.lt.s32.totalorder %s27, 1
        %s311 = scalar_select %p310, %s27, 1
        %p312 = scmp.lt.s32.totalorder %s28, 0
        %s313 = scalar_select %p312, %s28, 0
        %s314 = sadd.s32 %s313, %s311
        %s315 = smul.addr %s314, 4
        %s316 = scalar_lea.vmem %s2, %s315
        %p317 = scmp.lt.s32.totalorder %s27, 1
        %s318 = scalar_select %p317, %s27, 1
        %p319 = scmp.lt.s32.totalorder %s28, 0
        %s320 = scalar_select %p319, %s28, 0
        %s321 = sadd.s32 %s320, %s318
        %s322 = smul.addr %s321, 4
        %s323 = scalar_lea.vmem %s3, %s322
        %p324 = scmp.lt.s32.totalorder %s27, 1
        %s325 = scalar_select %p324, %s27, 1
        %p326 = scmp.lt.s32.totalorder %s28, 0
        %s327 = scalar_select %p326, %s28, 0
        %s328 = sadd.s32 %s327, %s325
        %s329 = smul.addr %s328, 4
        %s330 = scalar_lea.vmem %s4, %s329
        %p331 = scmp.eq.s32.totalorder %s29, 0
        // Predicated region
        $region37: #{tpu_custom_call.1} parent=27 // pred_check
          %p332 = pneg %p331
        $region38: #{tpu_custom_call.1} parent=27 // pred_check_branch
          %334 = sbr.rel (%p332) target = $region40
        $region39: #{tpu_custom_call.1} parent=27 // pred_region
          %vm335 = vcmask 3072
          %336 = vst.msk [vmem:[%s316] sm:$0xf] %vm335, 0.0
          %337 = vst.msk [vmem:[%s323] sm:$0xf] %vm335, 0.0
          %338 = vst.msk [vmem:[%s330] sm:$0xf] %vm335, 0.0
        $region40: #{tpu_custom_call.1} parent=27 // pred_fallthru
          _
        %v339 = vld [vmem:[%s262] sm:$0x3]
        %v340 = vld [vmem:[%s253] sm:$0x3]
        %vm341 = vcmp.eq.s32.totalorder %v339, 0
        %v342 = vld [vmem:[%s316] sm:$0x1]
        %v343 = vsel %vm341, %v340, 0.0
        %vm344 = vcmask 1041408
        %v345 = vsel %vm344, %v343, 0.0
        %v346 = vrot.slane %v345, 4
        %v347 = vadd.f32 %v345, %v346
        %v348 = vrot.slane %v347, 2
        %v349 = vadd.f32 %v347, %v348
        %v350 = vrot.slane %v349, 1
        %v351 = vadd.f32 %v349, %v350
        %352 = vadd.xlane.f32.xlu0 %v351
        %v353 = vpop.xlane.xlu0 %352
        %v354 = vadd.f32 %v342, %v353
        %vm355 = vcmask 0
        %356 = vst.msk [vmem:[%s316] sm:$0x1] %vm355, %v354
        %v357 = vld [vmem:[%s323] sm:$0x1]
        %v358 = vsel %vm344, %v340, 0.0
        %v359 = vrot.slane %v358, 4
        %v360 = vadd.f32 %v358, %v359
        %v361 = vrot.slane %v360, 2
        %v362 = vadd.f32 %v360, %v361
        %v363 = vrot.slane %v362, 1
        %v364 = vadd.f32 %v362, %v363
        %365 = vadd.xlane.f32.xlu0 %v364
        %v366 = vpop.xlane.xlu0 %365
        %v367 = vadd.f32 %v357, %v366
        %368 = vst.msk [vmem:[%s323] sm:$0x1] %vm355, %v367
        %v369 = vld [vmem:[%s330] sm:$0x1]
        %v370 = vsel %vm341, 1.0, 0.0
        %v371 = vsel %vm344, %v370, 0.0
        %v372 = vrot.slane %v371, 4
        %v373 = vadd.f32 %v371, %v372
        %v374 = vrot.slane %v373, 2
        %v375 = vadd.f32 %v373, %v374
        %v376 = vrot.slane %v375, 1
        %v377 = vadd.f32 %v375, %v376
        %378 = vadd.xlane.f32.xlu0 %v377
        %v379 = vpop.xlane.xlu0 %378
        %v380 = vadd.f32 %v369, %v379
        %381 = vst.msk [vmem:[%s330] sm:$0x1] %vm355, %v380
        %s382 = scalar_lea.vmem %s253, 2 [#allocation2]
        %v383 = vld [vmem:[%s382] sm:$0x3]
        %vm384 = vcmp.eq.s32.totalorder %v339, 1
        %v385 = vld [vmem:[%s316 + $0x1] sm:$0x1]
        %v386 = vsel %vm384, %v383, 0.0
        %v387 = vsel %vm344, %v386, 0.0
        %v388 = vrot.slane %v387, 4
        %v389 = vadd.f32 %v387, %v388
        %v390 = vrot.slane %v389, 2
        %v391 = vadd.f32 %v389, %v390
        %v392 = vrot.slane %v391, 1
        %v393 = vadd.f32 %v391, %v392
        %394 = vadd.xlane.f32.xlu0 %v393
        %v395 = vpop.xlane.xlu0 %394
        %v396 = vadd.f32 %v385, %v395
        %397 = vst.msk [vmem:[%s316 + $0x1] sm:$0x1] %vm355, %v396
        %v398 = vld [vmem:[%s323 + $0x1] sm:$0x1]
        %v399 = vsel %vm344, %v383, 0.0
        %v400 = vrot.slane %v399, 4
        %v401 = vadd.f32 %v399, %v400
        %v402 = vrot.slane %v401, 2
        %v403 = vadd.f32 %v401, %v402
        %v404 = vrot.slane %v403, 1
        %v405 = vadd.f32 %v403, %v404
        %406 = vadd.xlane.f32.xlu0 %v405
        %v407 = vpop.xlane.xlu0 %406
        %v408 = vadd.f32 %v398, %v407
        %409 = vst.msk [vmem:[%s323 + $0x1] sm:$0x1] %vm355, %v408
        %v410 = vld [vmem:[%s330 + $0x1] sm:$0x1]
        %v411 = vsel %vm384, 1.0, 0.0
        %v412 = vsel %vm344, %v411, 0.0
        %v413 = vrot.slane %v412, 4
        %v414 = vadd.f32 %v412, %v413
        %v415 = vrot.slane %v414, 2
        %v416 = vadd.f32 %v414, %v415
        %v417 = vrot.slane %v416, 1
        %v418 = vadd.f32 %v416, %v417
        %419 = vadd.xlane.f32.xlu0 %v418
        %v420 = vpop.xlane.xlu0 %419
        %v421 = vadd.f32 %v410, %v420
        %422 = vst.msk [vmem:[%s330 + $0x1] sm:$0x1] %vm355, %v421
        %s423 = scalar_lea.vmem %s253, 4 [#allocation2]
        %v424 = vld [vmem:[%s423] sm:$0x3]
        %vm425 = vcmp.eq.s32.totalorder %v339, 2
        %v426 = vld [vmem:[%s316 + $0x2] sm:$0x1]
        %v427 = vsel %vm425, %v424, 0.0
        %v428 = vsel %vm344, %v427, 0.0
        %v429 = vrot.slane %v428, 4
        %v430 = vadd.f32 %v428, %v429
        %v431 = vrot.slane %v430, 2
        %v432 = vadd.f32 %v430, %v431
        %v433 = vrot.slane %v432, 1
        %v434 = vadd.f32 %v432, %v433
        %435 = vadd.xlane.f32.xlu0 %v434
        %v436 = vpop.xlane.xlu0 %435
        %v437 = vadd.f32 %v426, %v436
        %438 = vst.msk [vmem:[%s316 + $0x2] sm:$0x1] %vm355, %v437
        %v439 = vld [vmem:[%s323 + $0x2] sm:$0x1]
        %v440 = vsel %vm344, %v424, 0.0
        %v441 = vrot.slane %v440, 4
        %v442 = vadd.f32 %v440, %v441
        %v443 = vrot.slane %v442, 2
        %v444 = vadd.f32 %v442, %v443
        %v445 = vrot.slane %v444, 1
        %v446 = vadd.f32 %v444, %v445
        %447 = vadd.xlane.f32.xlu0 %v446
        %v448 = vpop.xlane.xlu0 %447
        %v449 = vadd.f32 %v439, %v448
        %450 = vst.msk [vmem:[%s323 + $0x2] sm:$0x1] %vm355, %v449
        %v451 = vld [vmem:[%s330 + $0x2] sm:$0x1]
        %v452 = vsel %vm425, 1.0, 0.0
        %v453 = vsel %vm344, %v452, 0.0
        %v454 = vrot.slane %v453, 4
        %v455 = vadd.f32 %v453, %v454
        %v456 = vrot.slane %v455, 2
        %v457 = vadd.f32 %v455, %v456
        %v458 = vrot.slane %v457, 1
        %v459 = vadd.f32 %v457, %v458
        %460 = vadd.xlane.f32.xlu0 %v459
        %v461 = vpop.xlane.xlu0 %460
        %v462 = vadd.f32 %v451, %v461
        %463 = vst.msk [vmem:[%s330 + $0x2] sm:$0x1] %vm355, %v462
        %s464 = scalar_lea.vmem %s253, 6 [#allocation2]
        %v465 = vld [vmem:[%s464] sm:$0x3]
        %vm466 = vcmp.eq.s32.totalorder %v339, 3
        %v467 = vld [vmem:[%s316 + $0x3] sm:$0x1]
        %v468 = vsel %vm466, %v465, 0.0
        %v469 = vsel %vm344, %v468, 0.0
        %v470 = vrot.slane %v469, 4
        %v471 = vadd.f32 %v469, %v470
        %v472 = vrot.slane %v471, 2
        %v473 = vadd.f32 %v471, %v472
        %v474 = vrot.slane %v473, 1
        %v475 = vadd.f32 %v473, %v474
        %476 = vadd.xlane.f32.xlu0 %v475
        %v477 = vpop.xlane.xlu0 %476
        %v478 = vadd.f32 %v467, %v477
        %479 = vst.msk [vmem:[%s316 + $0x3] sm:$0x1] %vm355, %v478
        %v480 = vld [vmem:[%s323 + $0x3] sm:$0x1]
        %v481 = vsel %vm344, %v465, 0.0
        %v482 = vrot.slane %v481, 4
        %v483 = vadd.f32 %v481, %v482
        %v484 = vrot.slane %v483, 2
        %v485 = vadd.f32 %v483, %v484
        %v486 = vrot.slane %v485, 1
        %v487 = vadd.f32 %v485, %v486
        %488 = vadd.xlane.f32.xlu0 %v487
        %v489 = vpop.xlane.xlu0 %488
        %v490 = vadd.f32 %v480, %v489
        %491 = vst.msk [vmem:[%s323 + $0x3] sm:$0x1] %vm355, %v490
        %v492 = vld [vmem:[%s330 + $0x3] sm:$0x1]
        %v493 = vsel %vm466, 1.0, 0.0
        %v494 = vsel %vm344, %v493, 0.0
        %v495 = vrot.slane %v494, 4
        %v496 = vadd.f32 %v494, %v495
        %v497 = vrot.slane %v496, 2
        %v498 = vadd.f32 %v496, %v497
        %v499 = vrot.slane %v498, 1
        %v500 = vadd.f32 %v498, %v499
        %501 = vadd.xlane.f32.xlu0 %v500
        %v502 = vpop.xlane.xlu0 %501
        %v503 = vadd.f32 %v492, %v502
        %504 = vst.msk [vmem:[%s330 + $0x3] sm:$0x1] %vm355, %v503
        %p505 = scmp.lt.s32.totalorder %s27, 1
        %s506 = scalar_select %p505, %s27, 1
        %p507 = scmp.lt.s32.totalorder %s28, 0
        %s508 = scalar_select %p507, %s28, 0
        %s509 = sadd.s32 %s508, %s506
        %s510 = smul.addr %s509, 4
        %s511 = scalar_lea.vmem %s2, %s510
        %p512 = scmp.lt.s32.totalorder %s27, 1
        %s513 = scalar_select %p512, %s27, 1
        %p514 = scmp.lt.s32.totalorder %s28, 0
        %s515 = scalar_select %p514, %s28, 0
        %s516 = sadd.s32 %s515, %s513
        %s517 = smul.addr %s516, 4
        %s518 = scalar_lea.vmem %s3, %s517
        %p519 = scmp.lt.s32.totalorder %s27, 1
        %s520 = scalar_select %p519, %s27, 1
        %p521 = scmp.lt.s32.totalorder %s28, 0
        %s522 = scalar_select %p521, %s28, 0
        %s523 = sadd.s32 %s522, %s520
        %s524 = smul.addr %s523, 4
        %s525 = scalar_lea.vmem %s4, %s524
        // Predicated region
        $region41: #{tpu_custom_call.1} parent=27 // pred_check
          %p526 = pneg %p121
        $region42: #{tpu_custom_call.1} parent=27 // pred_check_branch
          %528 = sbr.rel (%p526) target = $region44
        $region43: #{tpu_custom_call.1} parent=27 // pred_region
          _
        $region44: #{tpu_custom_call.1} parent=27 // pred_fallthru
          _
        // Predicated region
        $region45: #{tpu_custom_call.1} parent=27 // pred_check
          %p529 = pneg %p149
        $region46: #{tpu_custom_call.1} parent=27 // pred_check_branch
          %531 = sbr.rel (%p529) target = $region48
        $region47: #{tpu_custom_call.1} parent=27 // pred_region
          _
        $region48: #{tpu_custom_call.1} parent=27 // pred_fallthru
          _
        // Predicated region
        $region49: #{tpu_custom_call.1} parent=27 // pred_check
          %p532 = pneg %p177
        $region50: #{tpu_custom_call.1} parent=27 // pred_check_branch
          %534 = sbr.rel (%p532) target = $region52
        $region51: #{tpu_custom_call.1} parent=27 // pred_region
          _
        $region52: #{tpu_custom_call.1} parent=27 // pred_fallthru
          _
      $region28: #{tpu_custom_call.1} parent=5 // pred_fallthru
        _
      %p535 = scmp.le.s32.totalorder 2, %s17
      // Predicated region
      $region53: #{tpu_custom_call.1} parent=5 // pred_check
        %p536 = pneg %p535
      $region54: #{tpu_custom_call.1} parent=5 // pred_check_branch
        %538 = sbr.rel (%p536) target = $region56
      $region55: #{tpu_custom_call.1} parent=5 // pred_region
        %s539 = ssub.s32 %s17, 2
        // Predicated region
        $region57: #{tpu_custom_call.1} parent=55 // pred_check
          %p540 = pneg %p127
        $region58: #{tpu_custom_call.1} parent=55 // pred_check_branch
          %542 = sbr.rel (%p540) target = $region60
        $region59: #{tpu_custom_call.1} parent=55 // pred_region
          %p543 = scmp.lt.s32.totalorder %s30, 1
          %s544 = scalar_select %p543, %s30, 1
          %p545 = scmp.lt.s32.totalorder %s31, 0
          %s546 = scalar_select %p545, %s31, 0
          %s547 = sadd.s32 %s546, %s544
          %s548 = smul.addr %s547, 4
          %s549 = scalar_lea.vmem %s2, %s548
        $region60: #{tpu_custom_call.1} parent=55 // pred_fallthru
          _
        // Predicated region
        $region61: #{tpu_custom_call.1} parent=55 // pred_check
          %p550 = pneg %p155
        $region62: #{tpu_custom_call.1} parent=55 // pred_check_branch
          %552 = sbr.rel (%p550) target = $region64
        $region63: #{tpu_custom_call.1} parent=55 // pred_region
          %p553 = scmp.lt.s32.totalorder %s30, 1
          %s554 = scalar_select %p553, %s30, 1
          %p555 = scmp.lt.s32.totalorder %s31, 0
          %s556 = scalar_select %p555, %s31, 0
          %s557 = sadd.s32 %s556, %s554
          %s558 = smul.addr %s557, 4
          %s559 = scalar_lea.vmem %s3, %s558
        $region64: #{tpu_custom_call.1} parent=55 // pred_fallthru
          _
        // Predicated region
        $region65: #{tpu_custom_call.1} parent=55 // pred_check
          %p560 = pneg %p183
        $region66: #{tpu_custom_call.1} parent=55 // pred_check_branch
          %562 = sbr.rel (%p560) target = $region68
        $region67: #{tpu_custom_call.1} parent=55 // pred_region
          %p563 = scmp.lt.s32.totalorder %s30, 1
          %s564 = scalar_select %p563, %s30, 1
          %p565 = scmp.lt.s32.totalorder %s31, 0
          %s566 = scalar_select %p565, %s31, 0
          %s567 = sadd.s32 %s566, %s564
          %s568 = smul.addr %s567, 4
          %s569 = scalar_lea.vmem %s4, %s568
        $region68: #{tpu_custom_call.1} parent=55 // pred_fallthru
          _
      $region56: #{tpu_custom_call.1} parent=5 // pred_fallthru
        _
    $region6: #{tpu_custom_call.1} parent=1 // loop_footer
      %s21 = sadd.s32 1, %s17
    $region7: #{tpu_custom_call.1} parent=1 // loop_footer_branch
      %16 = sbr.rel target = $region3
    $region8: #{tpu_custom_call.1} parent=1 // loop_exit
      _
    %570 = vsyncpa [#allocation3], 1
    %s571 = scalar_lea.sflag [#allocation3], 1
    %572 = vsyncpa %s571, 1
    %573 = vsyncpa [#allocation5], 1
    %s574 = scalar_lea.sflag [#allocation5], 1
    %575 = vsyncpa %s574, 1

</llo_original>
